<compile_context>
chip_gen: v6e
topology: v6e:2x2x1
jax: 0.10.0
libtpu: 0.0.40
codegen_flags: <defaults>
</compile_context>

<pallas_src>
import functools

import jax
import jax.numpy as jnp
from jax.experimental import pallas as pl
from jax.experimental.pallas import tpu as pltpu


def _round_up(x: int, m: int) -> int:
    return ((x + m - 1) // m) * m


def _vmem_cap_bytes() -> int:
    """Generation-aware VMEM cap (v7x: 64 MiB/TC, v5e/v6e: 128 MiB), with headroom."""
    try:
        phys = int(pltpu.get_tpu_info().vmem_capacity_bytes)
    except Exception:
        phys = 64 * 1024 * 1024  # conservative fallback (v7x-sized)
    return int(phys * 0.85)


def _fused_head_kernel(x_ref, w_ref, b_ref, out_ref):
    # Cast the streamed activation tile to the weight dtype (bf16) on the VPU
    # right before the MXU matmul (no wrapper-side astype copy of x in HBM).
    # Accumulate in f32, add bias on the VPU, lane-dense (mult-of-128) store.
    x = x_ref[...].astype(w_ref.dtype)
    acc = jnp.dot(x, w_ref[...], preferred_element_type=jnp.float32)
    out_ref[...] = (acc + b_ref[...]).astype(out_ref.dtype)


def prepare_fused_params(w_cls, b_cls, w_box, b_box, *, param_dtype=jnp.bfloat16):
    """One-time weight prep: transpose, concat cls|box, pad out-dim to 128 lanes.

    w_cls: (cls_out, D), w_box: (box_out, D) in PyTorch (out, in) layout.
    Note: bf16 weights slightly perturb the tiny-std bbox head; pass
    param_dtype=jnp.float32 if exact-f32 parity is required (slower MXU pass).
    """
    cls_out, _ = w_cls.shape
    box_out = w_box.shape[0]
    out_total = cls_out + box_out
    out_pad = _round_up(out_total, 128)

    w_cat = jnp.concatenate([jnp.transpose(w_cls), jnp.transpose(w_box)], axis=1)
    w_cat = jnp.pad(w_cat, ((0, 0), (0, out_pad - out_total)))            # (D, out_pad)
    b_cat = jnp.concatenate([b_cls, b_box], axis=0)
    b_cat = jnp.pad(b_cat, (0, out_pad - out_total)).reshape(1, out_pad)  # (1, out_pad)

    return {
        "w_cat": w_cat.astype(param_dtype),
        "b_cat": b_cat.astype(jnp.float32),
        "cls_out": int(cls_out),
        "box_out": int(box_out),
    }


def _choose_tile(n, d, out_pad, x_isz, w_isz, vmem_cap,
                 target_tile=1024, min_steps=2, align=8):
    """Pick a big row tile bounded by VMEM, with >=2 grid steps (v7x megacore)
    and padding waste bounded to <= one sublane group."""
    resident = 2 * (d * out_pad * w_isz + out_pad * 4)       # weights + bias (2 bufs)
    per_row = 2 * (d * x_isz + out_pad * 4)                   # double-buffered x + out
    max_tile = max(align, ((vmem_cap - resident) // max(per_row, 1)) // align * align)
    target = max(align, min(target_tile, max_tile))

    n_al = _round_up(max(n, 1), align)
    steps = pl.cdiv(n_al, target)
    if n_al >= 2 * align:
        steps = max(steps, min_steps)                          # keep both v7x TCs busy
    tile = min(_round_up(pl.cdiv(n_al, steps), align), max_tile)
    n_pad = _round_up(n_al, tile)
    return tile, n_pad


@functools.partial(jax.jit, static_argnames=("cls_out", "box_out"))
def _forward_impl(x, w_cat, b_cat, *, cls_out, box_out):
    x = jax.lax.stop_gradient(x)                 # x.detach()
    if x.ndim > 2:
        x = x.reshape(x.shape[0], -1)            # torch.flatten(x, start_dim=1)
    n, d = x.shape
    out_pad = w_cat.shape[1]
    x_isz = jnp.dtype(x.dtype).itemsize
    w_isz = jnp.dtype(w_cat.dtype).itemsize

    vmem_cap = _vmem_cap_bytes()
    tile, n_pad = _choose_tile(n, d, out_pad, x_isz, w_isz, vmem_cap)
    if n_pad != n:
        # Zero-filled pad rows produce just the bias and are sliced off below.
        x = jnp.pad(x, ((0, n_pad - n), (0, 0)))
    grid = (n_pad // tile,)

    # VMEM budget for the actual tile (double-buffered x/out + resident w/b).
    vmem_needed = (2 * tile * d * x_isz
                   + 2 * tile * out_pad * 4
                   + 2 * (d * out_pad * w_isz + out_pad * 4))
    vmem_limit = min(max(int(1.3 * vmem_needed) + (2 << 20), 16 * 1024 * 1024),
                     vmem_cap)

    cost = pl.CostEstimate(
        flops=2 * n_pad * d * out_pad,
        bytes_accessed=(n_pad * d * x_isz + d * out_pad * w_isz
                        + out_pad * 4 + n_pad * out_pad * 4),
        transcendentals=0,
    )

    out = pl.pallas_call(
        _fused_head_kernel,
        out_shape=jax.ShapeDtypeStruct((n_pad, out_pad), jnp.float32),
        grid=grid,
        in_specs=[
            pl.BlockSpec((tile, d), lambda i: (i, 0)),     # streamed x tile
            pl.BlockSpec((d, out_pad), lambda i: (0, 0)),  # resident fused weights
            pl.BlockSpec((1, out_pad), lambda i: (0, 0)),  # resident fused bias
        ],
        out_specs=pl.BlockSpec((tile, out_pad), lambda i: (i, 0)),
        compiler_params=pltpu.CompilerParams(
            dimension_semantics=("parallel",),
            vmem_limit_bytes=vmem_limit,
            allow_input_fusion=[True, False, False],       # fuse pad/cast into x operand
        ),
        cost_estimate=cost,
    )(x, w_cat, b_cat)

    # Slices stay inside this jit so they fuse into consumers (no extra copies).
    scores = out[:n, :cls_out]
    deltas = out[:n, cls_out:cls_out + box_out]
    return scores, deltas


def detached_predictor_forward(x, params):
    """x: (N, C, H, W) or (N, D) pooled ROI features; params from prepare_fused_params."""
    return _forward_impl(x, params["w_cat"], params["b_cat"],
                         cls_out=params["cls_out"], box_out=params["box_out"])


def init_params(key, in_features, num_classes):
    """Matches MinimalPredictorWrapper.init_cls: cls std=0.01, bbox std=0.001, bias=0."""
    k1, k2 = jax.random.split(key)
    cls_out = num_classes + 1            # + background class
    box_out = num_classes * 4            # class-specific box regression
    w_cls = 0.01 * jax.random.normal(k1, (cls_out, in_features), jnp.float32)
    b_cls = jnp.zeros((cls_out,), jnp.float32)
    w_box = 0.001 * jax.random.normal(k2, (box_out, in_features), jnp.float32)
    b_box = jnp.zeros((box_out,), jnp.float32)
    return w_cls, b_cls, w_box, b_box


# TODO(synk): losses()/inference()/reinit_head() of the wrapper are training /
# post-processing utilities outside forward() and are not implemented here.

if __name__ == "__main__":
    key = jax.random.PRNGKey(0)
    kx, kx2, kp = jax.random.split(key, 3)

    # Small pooled-ROI-feature-like input: (N, C, H, W) = (8, 4, 8, 8) -> D = 256.
    N, C, H, W = 8, 4, 8, 8
    D = C * H * W
    num_classes = 4
    x = jax.random.normal(kx, (N, C, H, W), jnp.float32)
    w_cls, b_cls, w_box, b_box = init_params(kp, D, num_classes)

    # One-time fused parameter prep (transpose + concat + lane-pad), reused per call.
    fused = prepare_fused_params(w_cls, b_cls, w_box, b_box)

    # Case 1: 4-D input (flatten path), single-tile grid.
    scores, deltas = detached_predictor_forward(x, fused)
    jax.block_until_ready((scores, deltas))

    xf = x.reshape(N, -1)
    ref_scores = xf @ w_cls.T + b_cls
    ref_deltas = xf @ w_box.T + b_box
    assert scores.shape == (N, num_classes + 1)
    assert deltas.shape == (N, num_classes * 4)
    assert jnp.allclose(scores, ref_scores, atol=2e-2, rtol=2e-2), (
        float(jnp.max(jnp.abs(scores - ref_scores))))
    assert jnp.allclose(deltas, ref_deltas, atol=2e-2, rtol=2e-2), (
        float(jnp.max(jnp.abs(deltas - ref_deltas))))

    # Case 2: already-flat 2-D input with a ragged N (multi-step grid + row padding).
    N2 = 300
    x2 = jax.random.normal(kx2, (N2, D), jnp.float32)
    scores2, deltas2 = detached_predictor_forward(x2, fused)
    jax.block_until_ready((scores2, deltas2))

    ref_scores2 = x2 @ w_cls.T + b_cls
    ref_deltas2 = x2 @ w_box.T + b_box
    assert scores2.shape == (N2, num_classes + 1)
    assert deltas2.shape == (N2, num_classes * 4)
    assert jnp.allclose(scores2, ref_scores2, atol=2e-2, rtol=2e-2), (
        float(jnp.max(jnp.abs(scores2 - ref_scores2))))
    assert jnp.allclose(deltas2, ref_deltas2, atol=2e-2, rtol=2e-2), (
        float(jnp.max(jnp.abs(deltas2 - ref_deltas2))))

    print("KERNEL_OK")
</pallas_src>

<mosaic_0001>
module attributes {stable_mosaic.version = 11 : i64} {
  func.func @_fused_head_kernel(%arg0: i32, %arg1: memref<8x256xf32, #tpu.memory_space<vmem>>, %arg2: memref<256x128xbf16, #tpu.memory_space<vmem>>, %arg3: memref<1x128xf32, #tpu.memory_space<vmem>>, %arg4: memref<8x128xf32, #tpu.memory_space<vmem>>) attributes {dimension_semantics = [#tpu.dimension_semantics<parallel>], iteration_bounds = array<i64: 1>, scalar_prefetch = 0 : i64, scratch_operands = 0 : i64, tpu.core_type = #tpu.core_type<tc>, window_params = [{transform_indices = @transform_0, window_bounds = array<i64: 8, 256>}, {pipeline_mode = #tpu.pipeline_mode<synchronous>, transform_indices = @transform_1, window_bounds = array<i64: 256, 128>}, {pipeline_mode = #tpu.pipeline_mode<synchronous>, transform_indices = @transform_2, window_bounds = array<i64: 1, 128>}, {transform_indices = @transform_3, window_bounds = array<i64: 8, 128>}]} {
    %c0 = arith.constant 0 : index
    %c0_0 = arith.constant 0 : index
    %0 = vector.load %arg1[%c0, %c0_0] : memref<8x256xf32, #tpu.memory_space<vmem>>, vector<8x256xf32>
    %1 = arith.truncf %0 : vector<8x256xf32> to vector<8x256xbf16>
    %c0_1 = arith.constant 0 : index
    %c0_2 = arith.constant 0 : index
    %2 = vector.load %arg2[%c0_1, %c0_2] : memref<256x128xbf16, #tpu.memory_space<vmem>>, vector<256x128xbf16>
    %cst = arith.constant dense<0.000000e+00> : vector<8x128xf32>
    %3 = tpu.matmul %1, %2, %cst {dimension_numbers = #tpu.dot_dimension_numbers<[1], [0], [0], [1], [0, 0, 1, 1], [], []>} : vector<8x256xbf16>, vector<256x128xbf16>, vector<8x128xf32> -> vector<8x128xf32>
    %c0_3 = arith.constant 0 : index
    %c0_4 = arith.constant 0 : index
    %4 = vector.load %arg3[%c0_3, %c0_4] : memref<1x128xf32, #tpu.memory_space<vmem>>, vector<1x128xf32>
    %5 = vector.broadcast %4 : vector<1x128xf32> to vector<8x128xf32>
    %6 = arith.addf %3, %5 : vector<8x128xf32>
    %c0_5 = arith.constant 0 : index
    %c0_6 = arith.constant 0 : index
    %7 = vector.load %arg4[%c0_5, %c0_6] : memref<8x128xf32, #tpu.memory_space<vmem>>, vector<8x128xf32>
    tpu.vector_store %arg4[%c0_5, %c0_6], %6 {strides = array<i32>} : memref<8x128xf32, #tpu.memory_space<vmem>>, vector<8x128xf32>,
    return
  }
  func.func @transform_0(%arg0: i32) -> (i32, i32) {
    %c0_i32 = arith.constant 0 : i32
    %c0_i32_0 = arith.constant 0 : i32
    return %arg0, %c0_i32 : i32, i32
  }
  func.func @transform_1(%arg0: i32) -> (i32, i32) {
    %c0_i32 = arith.constant 0 : i32
    %c0_i32_0 = arith.constant 0 : i32
    %c0_i32_1 = arith.constant 0 : i32
    return %c0_i32, %c0_i32_0 : i32, i32
  }
  func.func @transform_2(%arg0: i32) -> (i32, i32) {
    %c0_i32 = arith.constant 0 : i32
    %c0_i32_0 = arith.constant 0 : i32
    %c0_i32_1 = arith.constant 0 : i32
    return %c0_i32, %c0_i32_0 : i32, i32
  }
  func.func @transform_3(%arg0: i32) -> (i32, i32) {
    %c0_i32 = arith.constant 0 : i32
    %c0_i32_0 = arith.constant 0 : i32
    return %arg0, %c0_i32 : i32, i32
  }
}

</mosaic_0001>

<llo_original>
// kernel: _forward_impl.1
$region0: #{_forward_impl.1}
  #allocation0 [shape = 'u32[]', space=smem, size = 0x4, offset = 0x4, fixed_abs, tag = 'smem constant byte address 0x4 - core index']
  #allocation1 [shape = 'u32[144,128]{1,0:T(1,128)}', space=vmem, size = 0x12000, scoped, tag = 'internal scratch']
  %s0 = inlined_call_operand.vmem [shape: f32[8,256], index: 0, kind: input, shape index: {}]
  %s1 = inlined_call_operand.vmem [shape: bf16[256,128], index: 1, kind: input, shape index: {}]
  %s2 = inlined_call_operand.vmem [shape: f32[1,128], index: 2, kind: input, shape index: {}]
  %s3 = inlined_call_operand.vmem [shape: f32[8,128], index: 3, kind: output, shape index: {}]
  %s4 = sld [smem:[#allocation0]]
  $region22: #{_forward_impl.1} parent=0
    _
  %s6 = ssub.s32 1, %s4
  %s7 = scalar_select 0, %s6, %s4
  // Predicated region
  $region2: #{_forward_impl.1} parent=0 // pred_check
    _
  $region3: #{_forward_impl.1} parent=0 // pred_check_branch
    %9 = sbr.rel (0) target = $region5
  $region4: #{_forward_impl.1} parent=0 // pred_region
    _
  $region5: #{_forward_impl.1} parent=0 // pred_fallthru
    _
  // Predicated region
  $region6: #{_forward_impl.1} parent=0 // pred_check
    _
  $region7: #{_forward_impl.1} parent=0 // pred_check_branch
    %11 = sbr.rel (0) target = $region9
  $region8: #{_forward_impl.1} parent=0 // pred_region
    _
  $region9: #{_forward_impl.1} parent=0 // pred_fallthru
    _
  // Predicated region
  $region10: #{_forward_impl.1} parent=0 // pred_check
    _
  $region11: #{_forward_impl.1} parent=0 // pred_check_branch
    %13 = sbr.rel (0) target = $region13
  $region12: #{_forward_impl.1} parent=0 // pred_region
    _
  $region13: #{_forward_impl.1} parent=0 // pred_fallthru
    _
  %v15 = vld [vmem:[%s0] sm:$0xff]
  %v16 = vld [vmem:[%s0 + $0x8] sm:$0xff]
  %v17 = vpack.c.bf16 %v15, %v15
  %v18 = vpack.c.bf16 %v16, %v16
  %v19 = vld [vmem:[%s1] sm:$0xf]
  %v20 = vld [vmem:[%s1 + $0x4] sm:$0xf]
  %v21 = vld [vmem:[%s1 + $0x8] sm:$0xf]
  %v22 = vld [vmem:[%s1 + $0xc] sm:$0xf]
  %v23 = vld [vmem:[%s1 + $0x10] sm:$0xf]
  %v24 = vld [vmem:[%s1 + $0x14] sm:$0xf]
  %v25 = vld [vmem:[%s1 + $0x18] sm:$0xf]
  %v26 = vld [vmem:[%s1 + $0x1c] sm:$0xf]
  %v27 = vld [vmem:[%s1 + $0x20] sm:$0xf]
  %v28 = vld [vmem:[%s1 + $0x24] sm:$0xf]
  %v29 = vld [vmem:[%s1 + $0x28] sm:$0xf]
  %v30 = vld [vmem:[%s1 + $0x2c] sm:$0xf]
  %v31 = vld [vmem:[%s1 + $0x30] sm:$0xf]
  %v32 = vld [vmem:[%s1 + $0x34] sm:$0xf]
  %v33 = vld [vmem:[%s1 + $0x38] sm:$0xf]
  %v34 = vld [vmem:[%s1 + $0x3c] sm:$0xf]
  %v35 = vld [vmem:[%s1 + $0x40] sm:$0xf]
  %v36 = vld [vmem:[%s1 + $0x44] sm:$0xf]
  %v37 = vld [vmem:[%s1 + $0x48] sm:$0xf]
  %v38 = vld [vmem:[%s1 + $0x4c] sm:$0xf]
  %v39 = vld [vmem:[%s1 + $0x50] sm:$0xf]
  %v40 = vld [vmem:[%s1 + $0x54] sm:$0xf]
  %v41 = vld [vmem:[%s1 + $0x58] sm:$0xf]
  %v42 = vld [vmem:[%s1 + $0x5c] sm:$0xf]
  %v43 = vld [vmem:[%s1 + $0x60] sm:$0xf]
  %v44 = vld [vmem:[%s1 + $0x64] sm:$0xf]
  %v45 = vld [vmem:[%s1 + $0x68] sm:$0xf]
  %v46 = vld [vmem:[%s1 + $0x6c] sm:$0xf]
  %v47 = vld [vmem:[%s1 + $0x70] sm:$0xf]
  %v48 = vld [vmem:[%s1 + $0x74] sm:$0xf]
  %v49 = vld [vmem:[%s1 + $0x78] sm:$0xf]
  %v50 = vld [vmem:[%s1 + $0x7c] sm:$0xf]
  %v51 = vld [vmem:[%s2] sm:$0x1]
  %v53 = vlaneseq
  %v54 = vshrl.u32 %v53, 7
  %v55 = vsub.s32 0, %v54
  %v56 = vrot.slane %v51, %v55
  %v90 = vunpack.c.l.b16 %v19
  %v91 = vunpack.c.l.b16 %v20
  %v92 = vunpack.c.l.b16 %v21
  %v93 = vunpack.c.l.b16 %v22
  %v94 = vunpack.c.l.b16 %v23
  %v95 = vunpack.c.l.b16 %v24
  %v96 = vunpack.c.l.b16 %v25
  %v97 = vunpack.c.l.b16 %v26
  %v98 = vunpack.c.l.b16 %v27
  %v99 = vunpack.c.l.b16 %v28
  %v100 = vunpack.c.l.b16 %v29
  %v101 = vunpack.c.l.b16 %v30
  %v102 = vunpack.c.l.b16 %v31
  %v103 = vunpack.c.l.b16 %v32
  %v104 = vunpack.c.l.b16 %v33
  %v105 = vunpack.c.l.b16 %v34
  %v106 = vunpack.c.l.b16 %v35
  %v107 = vunpack.c.l.b16 %v36
  %v108 = vunpack.c.l.b16 %v37
  %v109 = vunpack.c.l.b16 %v38
  %v110 = vunpack.c.l.b16 %v39
  %v111 = vunpack.c.l.b16 %v40
  %v112 = vunpack.c.l.b16 %v41
  %v113 = vunpack.c.l.b16 %v42
  %v114 = vunpack.c.l.b16 %v43
  %v115 = vunpack.c.l.b16 %v44
  %v116 = vunpack.c.l.b16 %v45
  %v117 = vunpack.c.l.b16 %v46
  %v118 = vunpack.c.l.b16 %v47
  %v119 = vunpack.c.l.b16 %v48
  %v120 = vunpack.c.l.b16 %v49
  %v121 = vunpack.c.l.b16 %v50
  %v122 = vpack.c.b16 %v91, %v90
  %v123 = vpack.c.b16 %v93, %v92
  %v124 = vpack.c.b16 %v95, %v94
  %v125 = vpack.c.b16 %v97, %v96
  %v126 = vpack.c.b16 %v99, %v98
  %v127 = vpack.c.b16 %v101, %v100
  %v128 = vpack.c.b16 %v103, %v102
  %v129 = vpack.c.b16 %v105, %v104
  %v130 = vpack.c.b16 %v107, %v106
  %v131 = vpack.c.b16 %v109, %v108
  %v132 = vpack.c.b16 %v111, %v110
  %v133 = vpack.c.b16 %v113, %v112
  %v134 = vpack.c.b16 %v115, %v114
  %v135 = vpack.c.b16 %v117, %v116
  %v136 = vpack.c.b16 %v119, %v118
  %v137 = vpack.c.b16 %v121, %v120
  %154 = vmatprep.subr.bf16.mxu0 0
  %155 = vmatpush1.bf16.msra.mxu0 %v129
  %156 = vmatprep.subr.bf16.mxu0 0
  %157 = vmatpush1.bf16.msra.mxu0 %v128
  %158 = vmatprep.subr.bf16.mxu0 0
  %159 = vmatpush1.bf16.msra.mxu0 %v127
  %160 = vmatprep.subr.bf16.mxu0 0
  %161 = vmatpush1.bf16.msra.mxu0 %v126
  %162 = vmatprep.subr.bf16.mxu0 0
  %163 = vmatpush1.bf16.msra.mxu0 %v125
  %164 = vmatprep.subr.bf16.mxu0 0
  %165 = vmatpush1.bf16.msra.mxu0 %v124
  %166 = vmatprep.subr.bf16.mxu0 0
  %167 = vmatpush1.bf16.msra.mxu0 %v123
  %168 = vmatprep.subr.bf16.mxu0 0
  %169 = vmatpush1.bf16.msra.mxu0 %v122
  %170 = vmatprep.subr.bf16.mxu0 0
  %171 = vmatpush2.bf16.msra.mxu0 %v137
  %172 = vmatprep.subr.bf16.mxu0 0
  %173 = vmatpush2.bf16.msra.mxu0 %v136
  %174 = vmatprep.subr.bf16.mxu0 0
  %175 = vmatpush2.bf16.msra.mxu0 %v135
  %176 = vmatprep.subr.bf16.mxu0 0
  %177 = vmatpush2.bf16.msra.mxu0 %v134
  %178 = vmatprep.subr.bf16.mxu0 0
  %179 = vmatpush2.bf16.msra.mxu0 %v133
  %180 = vmatprep.subr.bf16.mxu0 0
  %181 = vmatpush2.bf16.msra.mxu0 %v132
  %182 = vmatprep.subr.bf16.mxu0 0
  %183 = vmatpush2.bf16.msra.mxu0 %v131
  %184 = vmatprep.subr.bf16.mxu0 0
  %185 = vmatpush2.bf16.msra.mxu0 %v130
  %186 = vmatprep.mubr.bf16.mxu0 %v18
  %187 = vmatmul.mubr.bf16.gmra.mxu0 %v17
  %v188 = vpop.f32.mrf.mxu0
  %v189 = vadd.f32 %v56, %v188
  %v190 = vpop.f32.mrf.mxu0
  %v191 = vpop.f32.mrf.mxu0
  %v192 = vpop.f32.mrf.mxu0
  %193 = vdwg.mxu0
  %194 = vst [vmem:[%s3] sm:$0xff] %v189
  // Predicated region
  $region14: #{_forward_impl.1} parent=0 // pred_check
    _
  $region15: #{_forward_impl.1} parent=0 // pred_check_branch
    %196 = sbr.rel (0) target = $region17
  $region16: #{_forward_impl.1} parent=0 // pred_region
    _
  $region17: #{_forward_impl.1} parent=0 // pred_fallthru
    _
  // Predicated region
  $region18: #{_forward_impl.1} parent=0 // pred_check
    _
  $region19: #{_forward_impl.1} parent=0 // pred_check_branch
    %198 = sbr.rel (0) target = $region21
  $region20: #{_forward_impl.1} parent=0 // pred_region
    _
  $region21: #{_forward_impl.1} parent=0 // pred_fallthru
    _

</llo_original>
